<compile_context>
chip_gen: v5e
topology: v5e:2x2
jax: 0.10.0
libtpu: 0.0.40
codegen_flags: <defaults>
</compile_context>

<pallas_src>
import jax
import jax.numpy as jnp
from jax.experimental import pallas as pl
from jax.experimental.pallas import tpu as pltpu


def _normalization_kernel(mean_ref, inv_std_ref, img_ref, out_ref):
    # mean_ref / inv_std_ref: (rb, 1) f32, broadcast over the lane axis.
    # img_ref / out_ref:      (rb, cl) tile of the flattened (N*C, H*W) view.
    x = img_ref[...].astype(jnp.float32)
    out_ref[...] = ((x - mean_ref[...]) * inv_std_ref[...]).astype(out_ref.dtype)


def _sublane_multiple(dtype):
    # Sub-32-bit dtypes pack rows along sublanes (bf16: 2/row-pair, int8: 4);
    # align row-tile counts to the packing factor to keep stores unmasked.
    return {4: 8, 2: 16, 1: 32}.get(jnp.dtype(dtype).itemsize, 8)


def _vmem_capacity_bytes():
    try:
        info = pltpu.get_tpu_info()
        cap = getattr(info, "vmem_capacity_bytes", None)
        if cap:
            return int(cap)
    except Exception:
        pass
    return 128 * 1024 * 1024  # conservative fallback (v5e/v6e physical VMEM)


def normalization_forward(img, mean, std):
    """(img - mean[:, None, None]) / std[:, None, None] for NCHW img."""
    N, C, H, W = img.shape
    assert mean.shape == (C,) and std.shape == (C,)

    rows = N * C
    L = H * W
    itemsize = jnp.dtype(img.dtype).itemsize
    sub = _sublane_multiple(img.dtype)

    # Per-row stats in f32; reciprocal computed once on the tiny (C,) vector.
    mean_f32 = mean.astype(jnp.float32)
    inv_std_f32 = 1.0 / std.astype(jnp.float32)
    mean_rows = jnp.broadcast_to(mean_f32[None, :], (N, C)).reshape(rows, 1)
    inv_std_rows = jnp.broadcast_to(inv_std_f32[None, :], (N, C)).reshape(rows, 1)

    # Lane-dense flattened view of the image (free for contiguous NCHW input).
    img2 = img.reshape(rows, L)

    # ---- Generation-aware tile budget -------------------------------------
    # Keep 2x(in+out) double-buffers well under VMEM: target <= vmem/16,
    # capped at 4 MiB (measured v6e streaming sweet spot), floored at 1 MiB.
    vmem_cap = _vmem_capacity_bytes()
    target_bytes = int(min(4 << 20, max(1 << 20, vmem_cap // 16)))

    row_bytes = L * itemsize
    if row_bytes * sub <= target_bytes:
        # At least one full sublane-group of full rows fits the budget:
        # keep the full lane extent and stack rows.
        cl = L
        r = target_bytes // row_bytes          # >= sub by construction
        if r >= rows:
            rb = rows                          # whole problem in one tile
        else:
            rb = max(sub, (r // sub) * sub)    # dtype-native sublane multiple
    else:
        # Even `sub` full rows exceed the budget: chunk the lane axis in
        # 128-multiples (fixes the old r<8 blow-up that forced ~16 MiB tiles).
        rb = min(rows, sub)
        cl_budget = target_bytes // (rb * itemsize)
        cl = min(L, max(128, (cl_budget // 128) * 128))

    # ---- Megacore: give v7x's second TensorCore work on medium problems ----
    total_bytes = rows * L * itemsize
    if (pl.cdiv(rows, rb) * pl.cdiv(L, cl) == 1
            and L >= 256 and total_bytes >= (256 << 10)):
        cl = max(128, ((L // 2) // 128) * 128)  # >=2 lane chunks, 128-aligned

    grid = (pl.cdiv(rows, rb), pl.cdiv(L, cl))  # rows outer, lanes inner:
                                                # stats tile stays resident.

    # ---- Explicit VMEM budget + scheduler hint ------------------------------
    tile_bytes = rb * cl * itemsize
    # 2x double-buffered (input + output) tiles + tiny stats blocks + margin.
    vmem_limit = int(max(16 << 20, min(vmem_cap // 2, 4 * tile_bytes + (4 << 20))))

    cost = pl.CostEstimate(
        flops=2 * rows * L,
        transcendentals=0,
        bytes_accessed=2 * rows * L * itemsize + 2 * rows * 4,
    )

    out2 = pl.pallas_call(
        _normalization_kernel,
        out_shape=jax.ShapeDtypeStruct((rows, L), img.dtype),
        grid_spec=pl.GridSpec(
            grid=grid,
            in_specs=[
                pl.BlockSpec((rb, 1), lambda i, j: (i, 0)),    # mean per row
                pl.BlockSpec((rb, 1), lambda i, j: (i, 0)),    # 1/std per row
                pl.BlockSpec((rb, cl), lambda i, j: (i, j)),   # image tile
            ],
            out_specs=pl.BlockSpec((rb, cl), lambda i, j: (i, j)),
        ),
        compiler_params=pltpu.CompilerParams(
            dimension_semantics=("parallel", "parallel"),
            vmem_limit_bytes=vmem_limit,
        ),
        cost_estimate=cost,
    )(mean_rows, inv_std_rows, img2)

    return out2.reshape(N, C, H, W)


if __name__ == "__main__":
    key = jax.random.PRNGKey(0)

    # Small shapes consistent with the module: batch=2, channels=4, spatial=16.
    N, C, H, W = 2, 4, 16, 16
    img = jax.random.uniform(key, (N, C, H, W), dtype=jnp.float32)

    # Deterministic per-channel statistics (the module's __init__ args).
    mean = jnp.array([0.485, 0.456, 0.406, 0.5], dtype=jnp.float32)
    std = jnp.array([0.229, 0.224, 0.225, 0.25], dtype=jnp.float32)

    out = normalization_forward(img, mean, std)
    out = jax.block_until_ready(out)

    # Reference check in plain JAX (same semantics as the PyTorch broadcast).
    ref = (img - mean[None, :, None, None]) / std[None, :, None, None]
    assert out.shape == (N, C, H, W)
    # Slightly relaxed tolerance: kernel uses (x - m) * (1/s) instead of a divide.
    assert jnp.allclose(out, ref, atol=1e-5, rtol=1e-5)

    print("KERNEL_OK")
</pallas_src>

<mosaic_0001>
module attributes {stable_mosaic.version = 11 : i64} {
  func.func @_normalization_kernel(%arg0: i32, %arg1: i32, %arg2: memref<8x1xf32, #tpu.memory_space<vmem>>, %arg3: memref<8x1xf32, #tpu.memory_space<vmem>>, %arg4: memref<8x256xf32, #tpu.memory_space<vmem>>, %arg5: memref<8x256xf32, #tpu.memory_space<vmem>>) attributes {dimension_semantics = [#tpu.dimension_semantics<parallel>, #tpu.dimension_semantics<parallel>], iteration_bounds = array<i64: 1, 1>, scalar_prefetch = 0 : i64, scratch_operands = 0 : i64, tpu.core_type = #tpu.core_type<tc>, window_params = [{transform_indices = @transform_0, window_bounds = array<i64: 8, 1>}, {transform_indices = @transform_1, window_bounds = array<i64: 8, 1>}, {transform_indices = @transform_2, window_bounds = array<i64: 8, 256>}, {transform_indices = @transform_3, window_bounds = array<i64: 8, 256>}]} {
    %c0 = arith.constant 0 : index
    %c0_0 = arith.constant 0 : index
    %0 = vector.load %arg4[%c0, %c0_0] : memref<8x256xf32, #tpu.memory_space<vmem>>, vector<8x256xf32>
    %c0_1 = arith.constant 0 : index
    %c0_2 = arith.constant 0 : index
    %1 = vector.load %arg2[%c0_1, %c0_2] : memref<8x1xf32, #tpu.memory_space<vmem>>, vector<8x1xf32>
    %2 = vector.broadcast %1 : vector<8x1xf32> to vector<8x256xf32>
    %3 = arith.subf %0, %2 : vector<8x256xf32>
    %c0_3 = arith.constant 0 : index
    %c0_4 = arith.constant 0 : index
    %4 = vector.load %arg3[%c0_3, %c0_4] : memref<8x1xf32, #tpu.memory_space<vmem>>, vector<8x1xf32>
    %5 = vector.broadcast %4 : vector<8x1xf32> to vector<8x256xf32>
    %6 = arith.mulf %3, %5 : vector<8x256xf32>
    %c0_5 = arith.constant 0 : index
    %c0_6 = arith.constant 0 : index
    %7 = vector.load %arg5[%c0_5, %c0_6] : memref<8x256xf32, #tpu.memory_space<vmem>>, vector<8x256xf32>
    tpu.vector_store %arg5[%c0_5, %c0_6], %6 {strides = array<i32>} : memref<8x256xf32, #tpu.memory_space<vmem>>, vector<8x256xf32>,
    return
  }
  func.func @transform_0(%arg0: i32, %arg1: i32) -> (i32, i32) {
    %c0_i32 = arith.constant 0 : i32
    %c0_i32_0 = arith.constant 0 : i32
    return %arg0, %c0_i32 : i32, i32
  }
  func.func @transform_1(%arg0: i32, %arg1: i32) -> (i32, i32) {
    %c0_i32 = arith.constant 0 : i32
    %c0_i32_0 = arith.constant 0 : i32
    return %arg0, %c0_i32 : i32, i32
  }
  func.func @transform_2(%arg0: i32, %arg1: i32) -> (i32, i32) {
    %c0_i32 = arith.constant 0 : i32
    return %arg0, %arg1 : i32, i32
  }
  func.func @transform_3(%arg0: i32, %arg1: i32) -> (i32, i32) {
    %c0_i32 = arith.constant 0 : i32
    return %arg0, %arg1 : i32, i32
  }
}

</mosaic_0001>

<llo_original>
// kernel: tpu_custom_call.1
$region0: #{tpu_custom_call.1}
  #allocation0 [shape = 'u32[]', space=smem, size = 0x4, offset = 0x4, fixed_abs, tag = 'smem constant byte address 0x4 - core index']
  #allocation1 [shape = 'u32[72,128]{1,0:T(1,128)}', space=vmem, size = 0x9000, scoped, tag = 'internal scratch']
  %s0 = inlined_call_operand.vmem [shape: f32[8,1], index: 0, kind: input, shape index: {}]
  %s1 = inlined_call_operand.vmem [shape: f32[8,1], index: 1, kind: input, shape index: {}]
  %s2 = inlined_call_operand.vmem [shape: f32[8,256], index: 2, kind: input, shape index: {}]
  %s3 = inlined_call_operand.hbm [shape: f32[8,256], index: 3, kind: output, shape index: {}]
  %s4 = sld [smem:[#allocation0]]
  $region22: #{tpu_custom_call.1} parent=0
    _
  %s6 = ssub.s32 1, %s4
  %s7 = scalar_select 0, %s6, %s4
  $region1: #{tpu_custom_call.1} parent=0
    #allocation2 [shape = 'u8[8192]{0}', space=vmem, size = 0x2000, scoped, tag = 'output window, operand 0, single buffered']
    #allocation3 [shape = 's32[1]{0}', space=sflag, size = 0x4, scoped, tag = 'scoped memory for tpu_custom_call.1']
    %8 = vsyncpa [#allocation3], 0
    // Predicated region
    $region2: #{tpu_custom_call.1} parent=1 // pred_check
      _
    $region3: #{tpu_custom_call.1} parent=1 // pred_check_branch
      %10 = sbr.rel (0) target = $region5
    $region4: #{tpu_custom_call.1} parent=1 // pred_region
      _
    $region5: #{tpu_custom_call.1} parent=1 // pred_fallthru
      _
    // Predicated region
    $region6: #{tpu_custom_call.1} parent=1 // pred_check
      _
    $region7: #{tpu_custom_call.1} parent=1 // pred_check_branch
      %12 = sbr.rel (0) target = $region9
    $region8: #{tpu_custom_call.1} parent=1 // pred_region
      _
    $region9: #{tpu_custom_call.1} parent=1 // pred_fallthru
      _
    // Predicated region
    $region10: #{tpu_custom_call.1} parent=1 // pred_check
      _
    $region11: #{tpu_custom_call.1} parent=1 // pred_check_branch
      %14 = sbr.rel (0) target = $region13
    $region12: #{tpu_custom_call.1} parent=1 // pred_region
      _
    $region13: #{tpu_custom_call.1} parent=1 // pred_fallthru
      _
    %v15 = vld [vmem:[%s2] sm:$0xff]
    %v16 = vld [vmem:[%s2 + $0x8] sm:$0xff]
    %v17 = vld [vmem:[%s0] sm:$0xff]
    %19 = vset.pattern.permute.xlu0 0
    %20 = vperm.xlu0 %19, %v17
    %v21 = vpop.permute.xlu0 %20
    %v23 = vsub.f32 %v15, %v21
    %v24 = vsub.f32 %v16, %v21
    %v25 = vld [vmem:[%s1] sm:$0xff]
    %27 = vset.pattern.permute.xlu0 0
    %28 = vperm.xlu0 %27, %v25
    %v29 = vpop.permute.xlu0 %28
    %v31 = vmul.f32 %v23, %v29
    %v32 = vmul.f32 %v24, %v29
    %33 = vst [vmem:[#allocation2] sm:$0xff] %v31
    %34 = vst [vmem:[#allocation2 + $0x8] sm:$0xff] %v32
    // Predicated region
    $region14: #{tpu_custom_call.1} parent=1 // pred_check
      _
    $region15: #{tpu_custom_call.1} parent=1 // pred_check_branch
      %36 = sbr.rel (0) target = $region17
    $region16: #{tpu_custom_call.1} parent=1 // pred_region
      %38 = vsyncadd [#allocation3], 0
      %s40 = sshll.u32 [#allocation2], 4
      %s41 = int_to_ptr.vmem [resolvable:$true] %s40
      %s42 = sshll.u32 %s3, 4
      %s43 = int_to_ptr.hbm [resolvable:$true] %s42
      %45 = dma.vmem_to_hbm [thread:$0]  %s41, 256, %s43, [#allocation3]
    $region17: #{tpu_custom_call.1} parent=1 // pred_fallthru
      _
    // Predicated region
    $region18: #{tpu_custom_call.1} parent=1 // pred_check
      _
    $region19: #{tpu_custom_call.1} parent=1 // pred_check_branch
      %47 = sbr.rel (0) target = $region21
    $region20: #{tpu_custom_call.1} parent=1 // pred_region
      %49 = dma.done [#allocation3], 256
    $region21: #{tpu_custom_call.1} parent=1 // pred_fallthru
      _
    %50 = vsyncpa [#allocation3], 1

</llo_original>
